<compile_context>
chip_gen: v7x
topology: tpu7x:2x2x1
jax: 0.10.0
libtpu: 0.0.40
codegen_flags: <defaults>
</compile_context>

<pallas_src>
import functools

import jax
import jax.numpy as jnp
from jax import lax
from jax.experimental import pallas as pl
from jax.experimental.pallas import tpu as pltpu


def _shift_rows(v, shift, tile_h):
    """s[r] = v[r + shift] if row r+shift stays inside the same tile_h-row image, else 0.

    v is (R, C) with R = n_images * tile_h (images stacked along rows); shift is
    a static Python int with |shift| < tile_h.  The wrapped rows of the circular
    roll are always masked, which also isolates the stacked images.
    """
    if shift == 0:
        return v
    rows = v.shape[0]
    rolled = pltpu.roll(v, (-shift) % rows, axis=0)   # rolled[r] = v[(r + shift) % rows]
    local = lax.broadcasted_iota(jnp.int32, v.shape, 0) % tile_h
    valid = jnp.logical_and(local + shift >= 0, local + shift < tile_h)
    return jnp.where(valid, rolled, jnp.zeros_like(rolled))


def _resblock_kernel(x_ref, t1_ref, b1_ref, t2_ref, b2_ref, o_ref, *, H, K, pack):
    """One batch block (Bblk images, rows stacked) per grid step.

    x_ref  : (R, W*Cin)  f32, R = Bblk*H, lanes = (x, ci)
    t1_ref : (K*W*Cin, W*Cout)  bf16 banded conv1 weights (kh major on rows)
    b1_ref : (1, W*Cout) f32
    t2_ref : (K*W*Cout, W*Cin)  bf16 banded conv2 weights
    b2_ref : (1, W*Cin)  f32
    o_ref  : (R//pack, pack*W*Cin)  lane-dense packed output
    """
    pad = K // 2
    x = x_ref[...]                                        # (R, W*Cin) f32

    # ---- conv1: single matmul, contraction = K*W*Cin (row taps folded into lanes) ----
    x_cat = jnp.concatenate(
        [_shift_rows(x, kh - pad, H) for kh in range(K)], axis=-1)
    acc1 = jnp.dot(x_cat.astype(jnp.bfloat16), t1_ref[...],
                   preferred_element_type=jnp.float32)    # (R, W*Cout)
    act1 = jnp.maximum(acc1 + b1_ref[...], 0.0)           # bias + ReLU, f32

    # ---- conv2: single matmul, contraction = K*W*Cout ----
    a_cat = jnp.concatenate(
        [_shift_rows(act1, kh - pad, H) for kh in range(K)], axis=-1)
    acc2 = jnp.dot(a_cat.astype(jnp.bfloat16), t2_ref[...],
                   preferred_element_type=jnp.float32)    # (R, W*Cin)

    # ---- bias + residual add + final ReLU (all f32 on the VPU) ----
    out = jnp.maximum(acc2 + b2_ref[...] + x, 0.0)

    # ---- lane-dense store: pack `pack` row-chunks side by side (last dim -> 128) ----
    if pack > 1:
        rh = out.shape[0] // pack
        out = jnp.concatenate(
            [out[i * rh:(i + 1) * rh] for i in range(pack)], axis=-1)
    o_ref[...] = out.astype(o_ref.dtype)


def _make_banded(w_oihw, W):
    """Fold the kw taps + channel mixing of an OIHW conv weight into one banded
    contraction matrix of shape (K*W*Ci, W*Co), kh-major along the rows:
      T[(kh*W + ws)*Ci + ci, x*Co + co] = w[co, ci, kh, ws - x + pad]
    with zeros off the band (which also implements the W-direction zero pad).
    """
    Co, Ci, K, _ = w_oihw.shape
    pad = K // 2
    # band[kw, ws, x] = 1  iff  ws - x == kw - pad
    band = jnp.stack([jnp.eye(W, W, k=pad - kw, dtype=w_oihw.dtype)
                      for kw in range(K)])                      # (K, W, W)
    T = jnp.einsum('ksx,oihk->hsixo', band, w_oihw)             # (K, W, Ci, W, Co)
    return T.reshape(K * W * Ci, W * Co)


def residual_block(x_nchw, w1, b1, w2, b2):
    """Forward pass matching the PyTorch ResidualBlock.

    x_nchw : (B, Cin, H, W)     float32
    w1     : (Cout, Cin, K, K)  conv1 weight (PyTorch OIHW)
    b1     : (Cout,)
    w2     : (Cin, Cout, K, K)  conv2 weight (PyTorch OIHW)
    b2     : (Cin,)
    returns: (B, Cin, H, W)
    """
    B, Cin, H, W = x_nchw.shape
    Cout, _, K, _ = w1.shape
    assert K % 2 == 1, "only odd kernel sizes give 'same' padding (as in the module)"
    WCi, WCo = W * Cin, W * Cout

    # ---- batch blocking: 2 parallel grid steps (v7x megacore), Bblk images each ----
    nstep = 2 if B >= 2 else 1
    Bblk = -(-B // nstep)
    Bp = nstep * Bblk
    R = Bblk * H                                        # rows per grid step

    # glue: NCHW -> stacked rows (b, h) x lanes (x, ci); pad batch to nstep*Bblk
    x_rows = jnp.transpose(x_nchw, (0, 2, 3, 1)).reshape(B, H, WCi)
    if Bp != B:
        x_rows = jnp.concatenate(
            [x_rows, jnp.zeros((Bp - B, H, WCi), x_rows.dtype)], axis=0)
    x_rows = x_rows.reshape(Bp * H, WCi)

    # banded weights (bf16 MXU operands), per-row bias tiles (f32)
    t1 = _make_banded(w1, W).astype(jnp.bfloat16)       # (K*W*Cin, W*Cout)
    t2 = _make_banded(w2, W).astype(jnp.bfloat16)       # (K*W*Cout, W*Cin)
    b1_row = jnp.tile(b1, W).reshape(1, WCo).astype(jnp.float32)
    b2_row = jnp.tile(b2, W).reshape(1, WCi).astype(jnp.float32)

    # lane-dense output packing factor (pack F row-chunks side by side -> 128 lanes)
    F = 1
    if WCi % 128 != 0 and 128 % WCi == 0:
        f = 128 // WCi
        if R % f == 0 and (R // f) % 8 == 0:
            F = f
    Rp = R // F

    kernel = functools.partial(_resblock_kernel, H=H, K=K, pack=F)

    out_packed = pl.pallas_call(
        kernel,
        out_shape=jax.ShapeDtypeStruct((nstep * Rp, WCi * F), x_nchw.dtype),
        grid_spec=pltpu.PrefetchScalarGridSpec(
            num_scalar_prefetch=0,
            grid=(nstep,),
            in_specs=[
                pl.BlockSpec((R, WCi), lambda s: (s, 0)),
                pl.BlockSpec((K * WCi, WCo), lambda s: (0, 0)),
                pl.BlockSpec((1, WCo), lambda s: (0, 0)),
                pl.BlockSpec((K * WCo, WCi), lambda s: (0, 0)),
                pl.BlockSpec((1, WCi), lambda s: (0, 0)),
            ],
            out_specs=pl.BlockSpec((Rp, WCi * F), lambda s: (s, 0)),
        ),
        compiler_params=pltpu.CompilerParams(
            dimension_semantics=("parallel",)),
    )(x_rows, t1, b1_row, t2, b2_row)

    # glue: de-interleave the lane packing, drop batch padding, back to NCHW
    out_rows = (out_packed.reshape(nstep, Rp, F, WCi)
                .transpose(0, 2, 1, 3)
                .reshape(Bp * H, WCi))
    out = out_rows.reshape(Bp, H, W, Cin)[:B]
    return jnp.transpose(out, (0, 3, 1, 2))


def _reference(x_nchw, w1, b1, w2, b2):
    """Pure-JAX reference (lax conv, NCHW) mirroring the PyTorch module."""
    dn = lax.conv_dimension_numbers(x_nchw.shape, w1.shape, ("NCHW", "OIHW", "NCHW"))
    pad = w1.shape[-1] // 2
    out = lax.conv_general_dilated(x_nchw, w1, (1, 1), [(pad, pad), (pad, pad)],
                                   dimension_numbers=dn) + b1[None, :, None, None]
    out = jnp.maximum(out, 0.0)
    dn2 = lax.conv_dimension_numbers(out.shape, w2.shape, ("NCHW", "OIHW", "NCHW"))
    out = lax.conv_general_dilated(out, w2, (1, 1), [(pad, pad), (pad, pad)],
                                   dimension_numbers=dn2) + b2[None, :, None, None]
    out = out + x_nchw
    return jnp.maximum(out, 0.0)


if __name__ == "__main__":
    B, Cin, Cout, H, W, K = 4, 4, 8, 16, 16, 3

    key = jax.random.PRNGKey(0)
    kx, k1, kb1, k2, kb2 = jax.random.split(key, 5)

    x = jax.random.normal(kx, (B, Cin, H, W), dtype=jnp.float32)
    # PyTorch Conv2d weight layout OIHW
    w1 = jax.random.normal(k1, (Cout, Cin, K, K), dtype=jnp.float32) * 0.1
    b1 = jax.random.normal(kb1, (Cout,), dtype=jnp.float32) * 0.1
    w2 = jax.random.normal(k2, (Cin, Cout, K, K), dtype=jnp.float32) * 0.1
    b2 = jax.random.normal(kb2, (Cin,), dtype=jnp.float32) * 0.1

    out = jax.block_until_ready(residual_block(x, w1, b1, w2, b2))
    ref = jax.block_until_ready(_reference(x, w1, b1, w2, b2))

    assert out.shape == ref.shape, (out.shape, ref.shape)
    # bf16 MXU operands with f32 accumulation -> tolerance looser than pure f32.
    max_err = float(jnp.max(jnp.abs(out - ref)))
    assert jnp.allclose(out, ref, atol=5e-2, rtol=5e-2), f"mismatch vs reference, max|err|={max_err}"

    print("KERNEL_OK")
</pallas_src>

<mosaic_0001>
module attributes {stable_mosaic.version = 11 : i64} {
  func.func @_resblock_kernel(%arg0: i32, %arg1: memref<32x64xf32, #tpu.memory_space<vmem>>, %arg2: memref<192x128xbf16, #tpu.memory_space<vmem>>, %arg3: memref<1x128xf32, #tpu.memory_space<vmem>>, %arg4: memref<384x64xbf16, #tpu.memory_space<vmem>>, %arg5: memref<1x64xf32, #tpu.memory_space<vmem>>, %arg6: memref<16x128xf32, #tpu.memory_space<vmem>>) attributes {dimension_semantics = [#tpu.dimension_semantics<parallel>], iteration_bounds = array<i64: 2>, scalar_prefetch = 0 : i64, scratch_operands = 0 : i64, tpu.core_type = #tpu.core_type<tc>, window_params = [{transform_indices = @transform_0, window_bounds = array<i64: 32, 64>}, {pipeline_mode = #tpu.pipeline_mode<synchronous>, transform_indices = @transform_1, window_bounds = array<i64: 192, 128>}, {pipeline_mode = #tpu.pipeline_mode<synchronous>, transform_indices = @transform_2, window_bounds = array<i64: 1, 128>}, {pipeline_mode = #tpu.pipeline_mode<synchronous>, transform_indices = @transform_3, window_bounds = array<i64: 384, 64>}, {pipeline_mode = #tpu.pipeline_mode<synchronous>, transform_indices = @transform_4, window_bounds = array<i64: 1, 64>}, {transform_indices = @transform_5, window_bounds = array<i64: 16, 128>}]} {
    %c0 = arith.constant 0 : index
    %c0_0 = arith.constant 0 : index
    %0 = vector.load %arg1[%c0, %c0_0] : memref<32x64xf32, #tpu.memory_space<vmem>>, vector<32x64xf32>
    %c1_i32 = arith.constant 1 : i32
    %1 = tpu.dynamic_rotate %0 by %c1_i32 dim 0 : vector<32x64xf32>, i32 -> vector<32x64xf32>
    %2 = tpu.iota {dimensions = array<i32: 0>} : vector<32x64xi32>
    %c16_i32 = arith.constant 16 : i32
    %c0_i32 = arith.constant 0 : i32
    %3 = arith.cmpi eq, %c16_i32, %c0_i32 : i32
    %c1_i32_1 = arith.constant 1 : i32
    %4 = arith.select %3, %c1_i32_1, %c16_i32 : i32
    %5 = vector.broadcast %4 : i32 to vector<32x64xi32>
    %6 = arith.remsi %2, %5 : vector<32x64xi32>
    %c0_i32_2 = arith.constant 0 : i32
    %7 = vector.broadcast %c0_i32_2 : i32 to vector<32x64xi32>
    %8 = arith.cmpi ne, %6, %7 : vector<32x64xi32>
    %c0_i32_3 = arith.constant 0 : i32
    %9 = vector.broadcast %c0_i32_3 : i32 to vector<32x64xi32>
    %10 = arith.cmpi slt, %6, %9 : vector<32x64xi32>
    %c0_i32_4 = arith.constant 0 : i32
    %11 = arith.cmpi slt, %4, %c0_i32_4 : i32
    %12 = vector.broadcast %11 : i1 to vector<32x64xi1>
    %13 = vector.broadcast %12 : vector<32x64xi1> to vector<32x64xi1>
    %14 = arith.xori %10, %13 : vector<32x64xi1>
    %15 = arith.andi %14, %8 : vector<32x64xi1>
    %16 = vector.broadcast %4 : i32 to vector<32x64xi32>
    %17 = arith.addi %6, %16 : vector<32x64xi32>
    %18 = arith.select %15, %17, %6 : vector<32x64xi1>, vector<32x64xi32>
    %c-1_i32 = arith.constant -1 : i32
    %19 = vector.broadcast %c-1_i32 : i32 to vector<32x64xi32>
    %20 = arith.addi %18, %19 : vector<32x64xi32>
    %c0_i32_5 = arith.constant 0 : i32
    %21 = vector.broadcast %c0_i32_5 : i32 to vector<32x64xi32>
    %22 = arith.cmpi sge, %20, %21 : vector<32x64xi32>
    %c-1_i32_6 = arith.constant -1 : i32
    %23 = vector.broadcast %c-1_i32_6 : i32 to vector<32x64xi32>
    %24 = arith.addi %18, %23 : vector<32x64xi32>
    %c16_i32_7 = arith.constant 16 : i32
    %25 = vector.broadcast %c16_i32_7 : i32 to vector<32x64xi32>
    %26 = arith.cmpi slt, %24, %25 : vector<32x64xi32>
    %27 = arith.andi %22, %26 : vector<32x64xi1>
    %cst = arith.constant 0.000000e+00 : f32
    %28 = vector.broadcast %cst : f32 to vector<32x64xf32>
    %29 = arith.select %27, %1, %28 : vector<32x64xi1>, vector<32x64xf32>
    %c31_i32 = arith.constant 31 : i32
    %30 = tpu.dynamic_rotate %0 by %c31_i32 dim 0 : vector<32x64xf32>, i32 -> vector<32x64xf32>
    %31 = tpu.iota {dimensions = array<i32: 0>} : vector<32x64xi32>
    %c16_i32_8 = arith.constant 16 : i32
    %c0_i32_9 = arith.constant 0 : i32
    %32 = arith.cmpi eq, %c16_i32_8, %c0_i32_9 : i32
    %c1_i32_10 = arith.constant 1 : i32
    %33 = arith.select %32, %c1_i32_10, %c16_i32_8 : i32
    %34 = vector.broadcast %33 : i32 to vector<32x64xi32>
    %35 = arith.remsi %31, %34 : vector<32x64xi32>
    %c0_i32_11 = arith.constant 0 : i32
    %36 = vector.broadcast %c0_i32_11 : i32 to vector<32x64xi32>
    %37 = arith.cmpi ne, %35, %36 : vector<32x64xi32>
    %c0_i32_12 = arith.constant 0 : i32
    %38 = vector.broadcast %c0_i32_12 : i32 to vector<32x64xi32>
    %39 = arith.cmpi slt, %35, %38 : vector<32x64xi32>
    %c0_i32_13 = arith.constant 0 : i32
    %40 = arith.cmpi slt, %33, %c0_i32_13 : i32
    %41 = vector.broadcast %40 : i1 to vector<32x64xi1>
    %42 = vector.broadcast %41 : vector<32x64xi1> to vector<32x64xi1>
    %43 = arith.xori %39, %42 : vector<32x64xi1>
    %44 = arith.andi %43, %37 : vector<32x64xi1>
    %45 = vector.broadcast %33 : i32 to vector<32x64xi32>
    %46 = arith.addi %35, %45 : vector<32x64xi32>
    %47 = arith.select %44, %46, %35 : vector<32x64xi1>, vector<32x64xi32>
    %c1_i32_14 = arith.constant 1 : i32
    %48 = vector.broadcast %c1_i32_14 : i32 to vector<32x64xi32>
    %49 = arith.addi %47, %48 : vector<32x64xi32>
    %c0_i32_15 = arith.constant 0 : i32
    %50 = vector.broadcast %c0_i32_15 : i32 to vector<32x64xi32>
    %51 = arith.cmpi sge, %49, %50 : vector<32x64xi32>
    %c1_i32_16 = arith.constant 1 : i32
    %52 = vector.broadcast %c1_i32_16 : i32 to vector<32x64xi32>
    %53 = arith.addi %47, %52 : vector<32x64xi32>
    %c16_i32_17 = arith.constant 16 : i32
    %54 = vector.broadcast %c16_i32_17 : i32 to vector<32x64xi32>
    %55 = arith.cmpi slt, %53, %54 : vector<32x64xi32>
    %56 = arith.andi %51, %55 : vector<32x64xi1>
    %cst_18 = arith.constant 0.000000e+00 : f32
    %57 = vector.broadcast %cst_18 : f32 to vector<32x64xf32>
    %58 = arith.select %56, %30, %57 : vector<32x64xi1>, vector<32x64xf32>
    %59 = tpu.concatenate %29, %0, %58 in 1 : vector<32x64xf32>, vector<32x64xf32>, vector<32x64xf32> -> vector<32x192xf32>
    %60 = arith.truncf %59 : vector<32x192xf32> to vector<32x192xbf16>
    %c0_19 = arith.constant 0 : index
    %c0_20 = arith.constant 0 : index
    %61 = vector.load %arg2[%c0_19, %c0_20] : memref<192x128xbf16, #tpu.memory_space<vmem>>, vector<192x128xbf16>
    %cst_21 = arith.constant dense<0.000000e+00> : vector<32x128xf32>
    %62 = tpu.matmul %60, %61, %cst_21 {dimension_numbers = #tpu.dot_dimension_numbers<[1], [0], [0], [1], [0, 0, 1, 1], [], []>} : vector<32x192xbf16>, vector<192x128xbf16>, vector<32x128xf32> -> vector<32x128xf32>
    %c0_22 = arith.constant 0 : index
    %c0_23 = arith.constant 0 : index
    %63 = vector.load %arg3[%c0_22, %c0_23] : memref<1x128xf32, #tpu.memory_space<vmem>>, vector<1x128xf32>
    %64 = vector.broadcast %63 : vector<1x128xf32> to vector<32x128xf32>
    %65 = arith.addf %62, %64 : vector<32x128xf32>
    %cst_24 = arith.constant 0.000000e+00 : f32
    %66 = vector.broadcast %cst_24 : f32 to vector<32x128xf32>
    %67 = arith.maximumf %65, %66 : vector<32x128xf32>
    %c1_i32_25 = arith.constant 1 : i32
    %68 = tpu.dynamic_rotate %67 by %c1_i32_25 dim 0 : vector<32x128xf32>, i32 -> vector<32x128xf32>
    %69 = tpu.iota {dimensions = array<i32: 0>} : vector<32x128xi32>
    %c16_i32_26 = arith.constant 16 : i32
    %c0_i32_27 = arith.constant 0 : i32
    %70 = arith.cmpi eq, %c16_i32_26, %c0_i32_27 : i32
    %c1_i32_28 = arith.constant 1 : i32
    %71 = arith.select %70, %c1_i32_28, %c16_i32_26 : i32
    %72 = vector.broadcast %71 : i32 to vector<32x128xi32>
    %73 = arith.remsi %69, %72 : vector<32x128xi32>
    %c0_i32_29 = arith.constant 0 : i32
    %74 = vector.broadcast %c0_i32_29 : i32 to vector<32x128xi32>
    %75 = arith.cmpi ne, %73, %74 : vector<32x128xi32>
    %c0_i32_30 = arith.constant 0 : i32
    %76 = vector.broadcast %c0_i32_30 : i32 to vector<32x128xi32>
    %77 = arith.cmpi slt, %73, %76 : vector<32x128xi32>
    %c0_i32_31 = arith.constant 0 : i32
    %78 = arith.cmpi slt, %71, %c0_i32_31 : i32
    %79 = vector.broadcast %78 : i1 to vector<32x128xi1>
    %80 = vector.broadcast %79 : vector<32x128xi1> to vector<32x128xi1>
    %81 = arith.xori %77, %80 : vector<32x128xi1>
    %82 = arith.andi %81, %75 : vector<32x128xi1>
    %83 = vector.broadcast %71 : i32 to vector<32x128xi32>
    %84 = arith.addi %73, %83 : vector<32x128xi32>
    %85 = arith.select %82, %84, %73 : vector<32x128xi1>, vector<32x128xi32>
    %c-1_i32_32 = arith.constant -1 : i32
    %86 = vector.broadcast %c-1_i32_32 : i32 to vector<32x128xi32>
    %87 = arith.addi %85, %86 : vector<32x128xi32>
    %c0_i32_33 = arith.constant 0 : i32
    %88 = vector.broadcast %c0_i32_33 : i32 to vector<32x128xi32>
    %89 = arith.cmpi sge, %87, %88 : vector<32x128xi32>
    %c-1_i32_34 = arith.constant -1 : i32
    %90 = vector.broadcast %c-1_i32_34 : i32 to vector<32x128xi32>
    %91 = arith.addi %85, %90 : vector<32x128xi32>
    %c16_i32_35 = arith.constant 16 : i32
    %92 = vector.broadcast %c16_i32_35 : i32 to vector<32x128xi32>
    %93 = arith.cmpi slt, %91, %92 : vector<32x128xi32>
    %94 = arith.andi %89, %93 : vector<32x128xi1>
    %cst_36 = arith.constant 0.000000e+00 : f32
    %95 = vector.broadcast %cst_36 : f32 to vector<32x128xf32>
    %96 = arith.select %94, %68, %95 : vector<32x128xi1>, vector<32x128xf32>
    %c31_i32_37 = arith.constant 31 : i32
    %97 = tpu.dynamic_rotate %67 by %c31_i32_37 dim 0 : vector<32x128xf32>, i32 -> vector<32x128xf32>
    %98 = tpu.iota {dimensions = array<i32: 0>} : vector<32x128xi32>
    %c16_i32_38 = arith.constant 16 : i32
    %c0_i32_39 = arith.constant 0 : i32
    %99 = arith.cmpi eq, %c16_i32_38, %c0_i32_39 : i32
    %c1_i32_40 = arith.constant 1 : i32
    %100 = arith.select %99, %c1_i32_40, %c16_i32_38 : i32
    %101 = vector.broadcast %100 : i32 to vector<32x128xi32>
    %102 = arith.remsi %98, %101 : vector<32x128xi32>
    %c0_i32_41 = arith.constant 0 : i32
    %103 = vector.broadcast %c0_i32_41 : i32 to vector<32x128xi32>
    %104 = arith.cmpi ne, %102, %103 : vector<32x128xi32>
    %c0_i32_42 = arith.constant 0 : i32
    %105 = vector.broadcast %c0_i32_42 : i32 to vector<32x128xi32>
    %106 = arith.cmpi slt, %102, %105 : vector<32x128xi32>
    %c0_i32_43 = arith.constant 0 : i32
    %107 = arith.cmpi slt, %100, %c0_i32_43 : i32
    %108 = vector.broadcast %107 : i1 to vector<32x128xi1>
    %109 = vector.broadcast %108 : vector<32x128xi1> to vector<32x128xi1>
    %110 = arith.xori %106, %109 : vector<32x128xi1>
    %111 = arith.andi %110, %104 : vector<32x128xi1>
    %112 = vector.broadcast %100 : i32 to vector<32x128xi32>
    %113 = arith.addi %102, %112 : vector<32x128xi32>
    %114 = arith.select %111, %113, %102 : vector<32x128xi1>, vector<32x128xi32>
    %c1_i32_44 = arith.constant 1 : i32
    %115 = vector.broadcast %c1_i32_44 : i32 to vector<32x128xi32>
    %116 = arith.addi %114, %115 : vector<32x128xi32>
    %c0_i32_45 = arith.constant 0 : i32
    %117 = vector.broadcast %c0_i32_45 : i32 to vector<32x128xi32>
    %118 = arith.cmpi sge, %116, %117 : vector<32x128xi32>
    %c1_i32_46 = arith.constant 1 : i32
    %119 = vector.broadcast %c1_i32_46 : i32 to vector<32x128xi32>
    %120 = arith.addi %114, %119 : vector<32x128xi32>
    %c16_i32_47 = arith.constant 16 : i32
    %121 = vector.broadcast %c16_i32_47 : i32 to vector<32x128xi32>
    %122 = arith.cmpi slt, %120, %121 : vector<32x128xi32>
    %123 = arith.andi %118, %122 : vector<32x128xi1>
    %cst_48 = arith.constant 0.000000e+00 : f32
    %124 = vector.broadcast %cst_48 : f32 to vector<32x128xf32>
    %125 = arith.select %123, %97, %124 : vector<32x128xi1>, vector<32x128xf32>
    %126 = tpu.concatenate %96, %67, %125 in 1 : vector<32x128xf32>, vector<32x128xf32>, vector<32x128xf32> -> vector<32x384xf32>
    %127 = arith.truncf %126 : vector<32x384xf32> to vector<32x384xbf16>
    %c0_49 = arith.constant 0 : index
    %c0_50 = arith.constant 0 : index
    %128 = vector.load %arg4[%c0_49, %c0_50] : memref<384x64xbf16, #tpu.memory_space<vmem>>, vector<384x64xbf16>
    %cst_51 = arith.constant dense<0.000000e+00> : vector<32x64xf32>
    %129 = tpu.matmul %127, %128, %cst_51 {dimension_numbers = #tpu.dot_dimension_numbers<[1], [0], [0], [1], [0, 0, 1, 1], [], []>} : vector<32x384xbf16>, vector<384x64xbf16>, vector<32x64xf32> -> vector<32x64xf32>
    %c0_52 = arith.constant 0 : index
    %c0_53 = arith.constant 0 : index
    %130 = vector.load %arg5[%c0_52, %c0_53] : memref<1x64xf32, #tpu.memory_space<vmem>>, vector<1x64xf32>
    %131 = vector.broadcast %130 : vector<1x64xf32> to vector<32x64xf32>
    %132 = arith.addf %129, %131 : vector<32x64xf32>
    %133 = arith.addf %132, %0 : vector<32x64xf32>
    %cst_54 = arith.constant 0.000000e+00 : f32
    %134 = vector.broadcast %cst_54 : f32 to vector<32x64xf32>
    %135 = arith.maximumf %133, %134 : vector<32x64xf32>
    %136 = vector.extract_strided_slice %135 {offsets = [0, 0], sizes = [16, 64], strides = [1, 1]} : vector<32x64xf32> to vector<16x64xf32>
    %137 = vector.extract_strided_slice %135 {offsets = [16, 0], sizes = [16, 64], strides = [1, 1]} : vector<32x64xf32> to vector<16x64xf32>
    %138 = tpu.concatenate %136, %137 in 1 : vector<16x64xf32>, vector<16x64xf32> -> vector<16x128xf32>
    %c0_55 = arith.constant 0 : index
    %c0_56 = arith.constant 0 : index
    %139 = vector.load %arg6[%c0_55, %c0_56] : memref<16x128xf32, #tpu.memory_space<vmem>>, vector<16x128xf32>
    tpu.vector_store %arg6[%c0_55, %c0_56], %138 {strides = array<i32>} : memref<16x128xf32, #tpu.memory_space<vmem>>, vector<16x128xf32>,
    return
  }
  func.func @transform_0(%arg0: i32) -> (i32, i32) {
    %c0_i32 = arith.constant 0 : i32
    %c0_i32_0 = arith.constant 0 : i32
    return %arg0, %c0_i32 : i32, i32
  }
  func.func @transform_1(%arg0: i32) -> (i32, i32) {
    %c0_i32 = arith.constant 0 : i32
    %c0_i32_0 = arith.constant 0 : i32
    %c0_i32_1 = arith.constant 0 : i32
    return %c0_i32, %c0_i32_0 : i32, i32
  }
  func.func @transform_2(%arg0: i32) -> (i32, i32) {
    %c0_i32 = arith.constant 0 : i32
    %c0_i32_0 = arith.constant 0 : i32
    %c0_i32_1 = arith.constant 0 : i32
    return %c0_i32, %c0_i32_0 : i32, i32
  }
  func.func @transform_3(%arg0: i32) -> (i32, i32) {
    %c0_i32 = arith.constant 0 : i32
    %c0_i32_0 = arith.constant 0 : i32
    %c0_i32_1 = arith.constant 0 : i32
    return %c0_i32, %c0_i32_0 : i32, i32
  }
  func.func @transform_4(%arg0: i32) -> (i32, i32) {
    %c0_i32 = arith.constant 0 : i32
    %c0_i32_0 = arith.constant 0 : i32
    %c0_i32_1 = arith.constant 0 : i32
    return %c0_i32, %c0_i32_0 : i32, i32
  }
  func.func @transform_5(%arg0: i32) -> (i32, i32) {
    %c0_i32 = arith.constant 0 : i32
    %c0_i32_0 = arith.constant 0 : i32
    return %arg0, %c0_i32 : i32, i32
  }
}

</mosaic_0001>

<llo_original>
// kernel: tpu_custom_call.1
$region0: #{tpu_custom_call.1}
  #allocation0 [shape = 'u32[]', space=smem, size = 0x4, offset = 0x4, fixed_abs, tag = 'smem constant byte address 0x4 - core index']
  #allocation1 [shape = 'u32[144,128]{1,0:T(1,128)}', space=vmem, size = 0x12000, scoped, tag = 'internal scratch']
  %s0 = inlined_call_operand.vmem [shape: f32[64,64], index: 0, kind: input, shape index: {}]
  %s1 = inlined_call_operand.vmem [shape: bf16[192,128], index: 1, kind: input, shape index: {}]
  %s2 = inlined_call_operand.vmem [shape: f32[1,128], index: 2, kind: input, shape index: {}]
  %s3 = inlined_call_operand.vmem [shape: bf16[384,64], index: 3, kind: input, shape index: {}]
  %s4 = inlined_call_operand.vmem [shape: f32[1,64], index: 4, kind: input, shape index: {}]
  %s5 = inlined_call_operand.hbm [shape: f32[32,128], index: 5, kind: output, shape index: {}]
  %s6 = sld [smem:[#allocation0]]
  $region53: #{tpu_custom_call.1} parent=0
    _
  %s8 = ssub.s32 1, %s6
  %s9 = scalar_select 0, %s8, %s6
  $region1: #{tpu_custom_call.1} parent=0
    #allocation2 [shape = 'u8[16384]{0}', space=vmem, size = 0x4000, scoped, tag = 'output window, operand 0']
    #allocation3 [shape = 's32[2]{0}', space=sflag, size = 0x8, scoped, tag = 'scoped memory for tpu_custom_call.1']
    %10 = vsyncpa [#allocation3], 0
    %s11 = scalar_lea.sflag [#allocation3], 1
    %12 = vsyncpa %s11, 0
    loop: start=0, step=1, limit=4
    $region2: #{tpu_custom_call.1} parent=1 // loop_pre_header
      _
    $region3: #{tpu_custom_call.1} parent=1 // loop_header
      %s14 = sphi 0, %s18
      %p15 = scmp.ge.s32.totalorder %s14, 4
      %s24 = sphi 0, %s26
      %s27 = sphi 0, %s24
      %s28 = sphi 0, %s27
      %s44 = sphi 0, %s28
      %s48 = sphi 0, %s48
      %s50 = sphi 0, %s48
      %s51 = sphi 0, %s50
      %s65 = sphi 0, %s51
      %s69 = sphi 0, %s69
      %s71 = sphi 0, %s69
      %s72 = sphi 0, %s71
      %s86 = sphi 0, %s72
      %s90 = sphi 0, %s90
      %s92 = sphi 0, %s90
      %s93 = sphi 0, %s92
      %s107 = sphi 0, %s93
      %s111 = sphi 0, %s111
      %s113 = sphi 0, %s111
      %s114 = sphi 0, %s113
      %s128 = sphi 0, %s114
      %s134 = sphi 0, %s136
      %s137 = sphi 0, %s134
      %s138 = sphi 0, %s137
      %s154 = sphi 0, %s138
    $region4: #{tpu_custom_call.1} parent=1 // loop_header_branch
      %17 = sbr.rel (%p15) target = $region8
    $region5: #{tpu_custom_call.1} parent=1 // loop_body
      %s19 = ssub.s32 %s14, 1
      %s20 = ssub.s32 %s14, 2
      %s21 = sadd.s32 %s14, 1
      %s22 = ssub.s32 %s14, %s21
      %p23 = scmp.eq.s32.totalorder %s22, 0
      %s25 = sadd.s32 %s24, 1
      %s26 = scalar_select %p23, %s24, %s25
      %p29 = pneg %p23
      %p30 = scmp.eq.s32.totalorder %s14, 1
      %p31 = por %p29, %p30
      %p32 = scmp.ne.s32.totalorder %s24, %s27
      %p33 = scmp.eq.s32.totalorder %s14, 0
      %p34 = por %p32, %p33
      %p35 = scmp.ne.s32.totalorder %s24, %s27
      %p36 = scmp.eq.s32.totalorder %s19, 1
      %p37 = por %p35, %p36
      %p38 = scmp.ne.s32.totalorder %s27, %s28
      %p39 = scmp.eq.s32.totalorder %s19, 0
      %p40 = por %p38, %p39
      %p41 = scmp.ne.s32.totalorder %s27, %s28
      %p42 = scmp.eq.s32.totalorder %s20, 1
      %p43 = por %p41, %p42
      %p45 = scmp.ne.s32.totalorder %s28, %s44
      %p46 = scmp.eq.s32.totalorder %s20, 0
      %p47 = por %p45, %p46
      %s49 = sadd.s32 %s48, 1
      %p52 = scmp.eq.s32.totalorder %s14, 1
      %p53 = scmp.ne.s32.totalorder %s48, %s50
      %p54 = scmp.eq.s32.totalorder %s14, 0
      %p55 = por %p53, %p54
      %p56 = scmp.ne.s32.totalorder %s48, %s50
      %p57 = scmp.eq.s32.totalorder %s19, 1
      %p58 = por %p56, %p57
      %p59 = scmp.ne.s32.totalorder %s50, %s51
      %p60 = scmp.eq.s32.totalorder %s19, 0
      %p61 = por %p59, %p60
      %p62 = scmp.ne.s32.totalorder %s50, %s51
      %p63 = scmp.eq.s32.totalorder %s20, 1
      %p64 = por %p62, %p63
      %p66 = scmp.ne.s32.totalorder %s51, %s65
      %p67 = scmp.eq.s32.totalorder %s20, 0
      %p68 = por %p66, %p67
      %s70 = sadd.s32 %s69, 1
      %p73 = scmp.eq.s32.totalorder %s14, 1
      %p74 = scmp.ne.s32.totalorder %s69, %s71
      %p75 = scmp.eq.s32.totalorder %s14, 0
      %p76 = por %p74, %p75
      %p77 = scmp.ne.s32.totalorder %s69, %s71
      %p78 = scmp.eq.s32.totalorder %s19, 1
      %p79 = por %p77, %p78
      %p80 = scmp.ne.s32.totalorder %s71, %s72
      %p81 = scmp.eq.s32.totalorder %s19, 0
      %p82 = por %p80, %p81
      %p83 = scmp.ne.s32.totalorder %s71, %s72
      %p84 = scmp.eq.s32.totalorder %s20, 1
      %p85 = por %p83, %p84
      %p87 = scmp.ne.s32.totalorder %s72, %s86
      %p88 = scmp.eq.s32.totalorder %s20, 0
      %p89 = por %p87, %p88
      %s91 = sadd.s32 %s90, 1
      %p94 = scmp.eq.s32.totalorder %s14, 1
      %p95 = scmp.ne.s32.totalorder %s90, %s92
      %p96 = scmp.eq.s32.totalorder %s14, 0
      %p97 = por %p95, %p96
      %p98 = scmp.ne.s32.totalorder %s90, %s92
      %p99 = scmp.eq.s32.totalorder %s19, 1
      %p100 = por %p98, %p99
      %p101 = scmp.ne.s32.totalorder %s92, %s93
      %p102 = scmp.eq.s32.totalorder %s19, 0
      %p103 = por %p101, %p102
      %p104 = scmp.ne.s32.totalorder %s92, %s93
      %p105 = scmp.eq.s32.totalorder %s20, 1
      %p106 = por %p104, %p105
      %p108 = scmp.ne.s32.totalorder %s93, %s107
      %p109 = scmp.eq.s32.totalorder %s20, 0
      %p110 = por %p108, %p109
      %s112 = sadd.s32 %s111, 1
      %p115 = scmp.eq.s32.totalorder %s14, 1
      %p116 = scmp.ne.s32.totalorder %s111, %s113
      %p117 = scmp.eq.s32.totalorder %s14, 0
      %p118 = por %p116, %p117
      %p119 = scmp.ne.s32.totalorder %s111, %s113
      %p120 = scmp.eq.s32.totalorder %s19, 1
      %p121 = por %p119, %p120
      %p122 = scmp.ne.s32.totalorder %s113, %s114
      %p123 = scmp.eq.s32.totalorder %s19, 0
      %p124 = por %p122, %p123
      %p125 = scmp.ne.s32.totalorder %s113, %s114
      %p126 = scmp.eq.s32.totalorder %s20, 1
      %p127 = por %p125, %p126
      %p129 = scmp.ne.s32.totalorder %s114, %s128
      %p130 = scmp.eq.s32.totalorder %s20, 0
      %p131 = por %p129, %p130
      %s132 = ssub.s32 %s14, %s21
      %p133 = scmp.eq.s32.totalorder %s132, 0
      %s135 = sadd.s32 %s134, 1
      %s136 = scalar_select %p133, %s134, %s135
      %p139 = pneg %p133
      %p140 = scmp.eq.s32.totalorder %s14, 1
      %p141 = por %p139, %p140
      %p142 = scmp.ne.s32.totalorder %s134, %s137
      %p143 = scmp.eq.s32.totalorder %s14, 0
      %p144 = por %p142, %p143
      %p145 = scmp.ne.s32.totalorder %s134, %s137
      %p146 = scmp.eq.s32.totalorder %s19, 1
      %p147 = por %p145, %p146
      %p148 = scmp.ne.s32.totalorder %s137, %s138
      %p149 = scmp.eq.s32.totalorder %s19, 0
      %p150 = por %p148, %p149
      %p151 = scmp.ne.s32.totalorder %s137, %s138
      %p152 = scmp.eq.s32.totalorder %s20, 1
      %p153 = por %p151, %p152
      %p155 = scmp.ne.s32.totalorder %s138, %s154
      %p156 = scmp.eq.s32.totalorder %s20, 0
      %p157 = por %p155, %p156
      %p158 = scmp.le.s32.totalorder 1, %s14
      %p159 = scmp.lt.s32.totalorder %s14, 3
      %p160 = pnand %p158, %p159
      %p161 = pneg %p160
      // Predicated region
      $region9: #{tpu_custom_call.1} parent=5 // pred_check
        _
      $region10: #{tpu_custom_call.1} parent=5 // pred_check_branch
        %163 = sbr.rel (%p160) target = $region12
      $region11: #{tpu_custom_call.1} parent=5 // pred_region
        %s164 = ssub.s32 %s14, 1
        // Predicated region
        $region13: #{tpu_custom_call.1} parent=11 // pred_check
          %p165 = pneg %p61
        $region14: #{tpu_custom_call.1} parent=11 // pred_check_branch
          %167 = sbr.rel (%p165) target = $region16
        $region15: #{tpu_custom_call.1} parent=11 // pred_region
          _
        $region16: #{tpu_custom_call.1} parent=11 // pred_fallthru
          _
        // Predicated region
        $region17: #{tpu_custom_call.1} parent=11 // pred_check
          %p168 = pneg %p82
        $region18: #{tpu_custom_call.1} parent=11 // pred_check_branch
          %170 = sbr.rel (%p168) target = $region20
        $region19: #{tpu_custom_call.1} parent=11 // pred_region
          _
        $region20: #{tpu_custom_call.1} parent=11 // pred_fallthru
          _
        // Predicated region
        $region21: #{tpu_custom_call.1} parent=11 // pred_check
          %p171 = pneg %p103
        $region22: #{tpu_custom_call.1} parent=11 // pred_check_branch
          %173 = sbr.rel (%p171) target = $region24
        $region23: #{tpu_custom_call.1} parent=11 // pred_region
          _
        $region24: #{tpu_custom_call.1} parent=11 // pred_fallthru
          _
        // Predicated region
        $region25: #{tpu_custom_call.1} parent=11 // pred_check
          %p174 = pneg %p124
        $region26: #{tpu_custom_call.1} parent=11 // pred_check_branch
          %176 = sbr.rel (%p174) target = $region28
        $region27: #{tpu_custom_call.1} parent=11 // pred_region
          _
        $region28: #{tpu_custom_call.1} parent=11 // pred_fallthru
          _
      $region12: #{tpu_custom_call.1} parent=5 // pred_fallthru
        _
      %p177 = scmp.lt.s32.totalorder %s14, 2
      // Predicated region
      $region29: #{tpu_custom_call.1} parent=5 // pred_check
        %p178 = pneg %p177
      $region30: #{tpu_custom_call.1} parent=5 // pred_check_branch
        %180 = sbr.rel (%p178) target = $region32
      $region31: #{tpu_custom_call.1} parent=5 // pred_region
        // Predicated region
        $region33: #{tpu_custom_call.1} parent=31 // pred_check
          %p181 = pneg %p34
        $region34: #{tpu_custom_call.1} parent=31 // pred_check_branch
          %183 = sbr.rel (%p181) target = $region36
        $region35: #{tpu_custom_call.1} parent=31 // pred_region
          %s184 = smul.u32 4, %s14
          %p185 = scmp.lt.s32.totalorder %s184, 7
          %s186 = scalar_select %p185, %s184, 7
          %s187 = smul.addr %s186, 8
          %s188 = scalar_lea.vmem %s0, %s187
          %s189 = smul.u32 4, %s14
        $region36: #{tpu_custom_call.1} parent=31 // pred_fallthru
          _
      $region32: #{tpu_custom_call.1} parent=5 // pred_fallthru
        _
      %p190 = scmp.le.s32.totalorder 1, %s14
      %p191 = scmp.lt.s32.totalorder %s14, 3
      %p192 = pnand %p190, %p191
      %p193 = pneg %p192
      // Predicated region
      $region37: #{tpu_custom_call.1} parent=5 // pred_check
        _
      $region38: #{tpu_custom_call.1} parent=5 // pred_check_branch
        %195 = sbr.rel (%p192) target = $region40
      $region39: #{tpu_custom_call.1} parent=5 // pred_region
        %s196 = ssub.s32 %s14, 1
        %s197 = smul.u32 4, %s19
        %p198 = scmp.lt.s32.totalorder %s197, 7
        %s199 = scalar_select %p198, %s197, 7
        %s200 = smul.addr %s199, 8
        %s201 = scalar_lea.vmem %s0, %s200
        %p202 = pneg %p40
        %p203 = pneg %p37
        %p204 = pneg %p61
        %p205 = pneg %p58
        %p206 = pneg %p82
        %p207 = pneg %p79
        %p208 = pneg %p103
        %p209 = pneg %p100
        %p210 = pneg %p124
        %p211 = pneg %p121
        %p212 = pneg %p150
        %p213 = pneg %p147
        %s214 = sand.u32 %s137, 1
        %s215 = scalar_lea.sflag [#allocation3], %s214
        %s216 = sand.u32 %s137, 1
        %s217 = smul.addr %s216, 16
        %s218 = scalar_lea.vmem [#allocation2], %s217
        %s219 = smul.u32 4, %s19
        %p220 = scmp.lt.s32.totalorder %s219, 7
        %s221 = scalar_select %p220, %s219, 7
        %s222 = smul.addr %s221, 8
        %s223 = scalar_lea.vmem %s0, %s222
        %s224 = smul.u32 4, %s19
        %s225 = smul.u32 2, %s19
        %v227 = vld [vmem:[%s223] sm:$0xff]
        %v228 = vld [vmem:[%s223 + $0x8] sm:$0xff]
        %v229 = vld [vmem:[%s223 + $0x10] sm:$0xff]
        %v230 = vld [vmem:[%s223 + $0x18] sm:$0xff]
        %v231 = vrot.slane %v227, 7
        %v232 = vrot.slane %v228, 7
        %v233 = vrot.slane %v229, 7
        %v234 = vrot.slane %v230, 7
        %v235 = vlaneseq
        %v236 = vshrl.u32 %v235, 7
        %vm237 = vcmp.lt.s32.totalorder %v236, 1
        %v238 = vsel %vm237, %v233, %v234
        %v239 = vsel %vm237, %v232, %v233
        %v240 = vsel %vm237, %v231, %v232
        %v241 = vsel %vm237, %v234, %v231
        %v242 = vadd.s32 %v236, 8
        %v243 = vadd.s32 %v236, 16
        %v244 = vadd.s32 %v236, 24
        %vm245 = vcmp.lt.s32.totalorder %v236, 0
        %v246 = vsub.s32 0, %v236
        %v247 = vsel %vm245, %v246, %v236
        %v248 = vshrl.u32 %v247, 4
        %v249 = vand.u32 %v247, 15
        %v250 = vsub.s32 0, %v249
        %v251 = vsel %vm245, %v250, %v249
        %vm252 = vcmp.lt.s32.totalorder %v242, 0
        %v253 = vsub.s32 0, %v242
        %v254 = vsel %vm252, %v253, %v242
        %v255 = vshrl.u32 %v254, 4
        %v256 = vand.u32 %v254, 15
        %v257 = vsub.s32 0, %v256
        %v258 = vsel %vm252, %v257, %v256
        %vm259 = vcmp.lt.s32.totalorder %v243, 0
        %v260 = vsub.s32 0, %v243
        %v261 = vsel %vm259, %v260, %v243
        %v262 = vshrl.u32 %v261, 4
        %v263 = vand.u32 %v261, 15
        %v264 = vsub.s32 0, %v263
        %v265 = vsel %vm259, %v264, %v263
        %vm266 = vcmp.lt.s32.totalorder %v244, 0
        %v267 = vsub.s32 0, %v244
        %v268 = vsel %vm266, %v267, %v244
        %v269 = vshrl.u32 %v268, 4
        %v270 = vand.u32 %v268, 15
        %v271 = vsub.s32 0, %v270
        %v272 = vsel %vm266, %v271, %v270
        %vm273 = vcmp.ne.s32.totalorder %v251, 0
        %vm274 = vcmp.ne.s32.totalorder %v258, 0
        %vm275 = vcmp.ne.s32.totalorder %v265, 0
        %vm276 = vcmp.ne.s32.totalorder %v272, 0
        %vm277 = vcmp.lt.s32.totalorder %v251, 0
        %vm278 = vcmp.lt.s32.totalorder %v258, 0
        %vm279 = vcmp.lt.s32.totalorder %v265, 0
        %vm280 = vcmp.lt.s32.totalorder %v272, 0
        %vm281 = vmand %vm277, %vm273
        %vm282 = vmand %vm278, %vm274
        %vm283 = vmand %vm279, %vm275
        %vm284 = vmand %vm280, %vm276
        %v285 = vadd.s32 %v251, 16
        %v286 = vadd.s32 %v258, 16
        %v287 = vadd.s32 %v265, 16
        %v288 = vadd.s32 %v272, 16
        %v289 = vsel %vm281, %v285, %v251
        %v290 = vsel %vm282, %v286, %v258
        %v291 = vsel %vm283, %v287, %v265
        %v292 = vsel %vm284, %v288, %v272
        %v293 = vadd.s32 %v289, 4294967295
        %v294 = vadd.s32 %v290, 4294967295
        %v295 = vadd.s32 %v291, 4294967295
        %v296 = vadd.s32 %v292, 4294967295
        %vm297 = vcmp.ge.s32.totalorder %v293, 0
        %vm298 = vcmp.ge.s32.totalorder %v294, 0
        %vm299 = vcmp.ge.s32.totalorder %v295, 0
        %vm300 = vcmp.ge.s32.totalorder %v296, 0
        %vm301 = vcmp.lt.s32.totalorder %v293, 16
        %vm302 = vcmp.lt.s32.totalorder %v294, 16
        %vm303 = vcmp.lt.s32.totalorder %v295, 16
        %vm304 = vcmp.lt.s32.totalorder %v296, 16
        %vm305 = vmand %vm297, %vm301
        %vm306 = vmand %vm298, %vm302
        %vm307 = vmand %vm299, %vm303
        %vm308 = vmand %vm300, %vm304
        %v309 = vsel %vm305, %v241, 0.0
        %v310 = vsel %vm306, %v240, 0.0
        %v311 = vsel %vm307, %v239, 0.0
        %v312 = vsel %vm308, %v238, 0.0
        %v313 = vrot.slane %v227, 1
        %v314 = vrot.slane %v228, 1
        %v315 = vrot.slane %v229, 1
        %v316 = vrot.slane %v230, 1
        %vm317 = vcmp.lt.s32.totalorder %v236, 7
        %v318 = vsel %vm317, %v315, %v316
        %v319 = vsel %vm317, %v314, %v315
        %v320 = vsel %vm317, %v313, %v314
        %v321 = vsel %vm317, %v316, %v313
        %v322 = vadd.s32 %v289, 1
        %v323 = vadd.s32 %v290, 1
        %v324 = vadd.s32 %v291, 1
        %v325 = vadd.s32 %v292, 1
        %vm326 = vcmp.ge.s32.totalorder %v322, 0
        %vm327 = vcmp.ge.s32.totalorder %v323, 0
        %vm328 = vcmp.ge.s32.totalorder %v324, 0
        %vm329 = vcmp.ge.s32.totalorder %v325, 0
        %vm330 = vcmp.lt.s32.totalorder %v322, 16
        %vm331 = vcmp.lt.s32.totalorder %v323, 16
        %vm332 = vcmp.lt.s32.totalorder %v324, 16
        %vm333 = vcmp.lt.s32.totalorder %v325, 16
        %vm334 = vmand %vm326, %vm330
        %vm335 = vmand %vm327, %vm331
        %vm336 = vmand %vm328, %vm332
        %vm337 = vmand %vm329, %vm333
        %v338 = vsel %vm334, %v320, 0.0
        %v339 = vsel %vm335, %v319, 0.0
        %v340 = vsel %vm336, %v318, 0.0
        %v341 = vsel %vm337, %v321, 0.0
        %346 = vrot.lane.b32.xlu0 %v227, 64
        %v347 = vpop.permute.xlu0 %346
        %348 = vrot.lane.b32.xlu0 %v228, 64
        %v349 = vpop.permute.xlu0 %348
        %350 = vrot.lane.b32.xlu0 %v229, 64
        %v351 = vpop.permute.xlu0 %350
        %352 = vrot.lane.b32.xlu0 %v230, 64
        %v353 = vpop.permute.xlu0 %352
        %vm358 = vcmask 523264
        %v359 = vsel %vm358, %v309, %v347
        %v360 = vsel %vm358, %v310, %v349
        %v361 = vsel %vm358, %v311, %v351
        %v362 = vsel %vm358, %v312, %v353
        %v363 = vpack.c.bf16 %v360, %v359
        %v364 = vpack.c.bf16 %v339, %v338
        %v365 = vpack.c.bf16 %v362, %v361
        %v366 = vpack.c.bf16 %v341, %v340
        %v367 = vld [vmem:[%s1] sm:$0xf]
        %v368 = vld [vmem:[%s1 + $0x4] sm:$0xf]
        %v369 = vld [vmem:[%s1 + $0x8] sm:$0xf]
        %v370 = vld [vmem:[%s1 + $0xc] sm:$0xf]
        %v371 = vld [vmem:[%s1 + $0x10] sm:$0xf]
        %v372 = vld [vmem:[%s1 + $0x14] sm:$0xf]
        %v373 = vld [vmem:[%s1 + $0x18] sm:$0xf]
        %v374 = vld [vmem:[%s1 + $0x1c] sm:$0xf]
        %v375 = vld [vmem:[%s1 + $0x20] sm:$0xf]
        %v376 = vld [vmem:[%s1 + $0x24] sm:$0xf]
        %v377 = vld [vmem:[%s1 + $0x28] sm:$0xf]
        %v378 = vld [vmem:[%s1 + $0x2c] sm:$0xf]
        %v379 = vld [vmem:[%s1 + $0x30] sm:$0xf]
        %v380 = vld [vmem:[%s1 + $0x34] sm:$0xf]
        %v381 = vld [vmem:[%s1 + $0x38] sm:$0xf]
        %v382 = vld [vmem:[%s1 + $0x3c] sm:$0xf]
        %v383 = vld [vmem:[%s1 + $0x40] sm:$0xf]
        %v384 = vld [vmem:[%s1 + $0x44] sm:$0xf]
        %v385 = vld [vmem:[%s1 + $0x48] sm:$0xf]
        %v386 = vld [vmem:[%s1 + $0x4c] sm:$0xf]
        %v387 = vld [vmem:[%s1 + $0x50] sm:$0xf]
        %v388 = vld [vmem:[%s1 + $0x54] sm:$0xf]
        %v389 = vld [vmem:[%s1 + $0x58] sm:$0xf]
        %v390 = vld [vmem:[%s1 + $0x5c] sm:$0xf]
        %v391 = vld [vmem:[%s2] sm:$0x1]
        %v393 = vlaneseq
        %v394 = vshrl.u32 %v393, 7
        %v395 = vsub.s32 0, %v394
        %v396 = vrot.slane %v391, %v395
        %v422 = vunpack.c.l.b16 %v367
        %v423 = vunpack.c.l.b16 %v368
        %v424 = vunpack.c.l.b16 %v369
        %v425 = vunpack.c.l.b16 %v370
        %v426 = vunpack.c.l.b16 %v371
        %v427 = vunpack.c.l.b16 %v372
        %v428 = vunpack.c.l.b16 %v373
        %v429 = vunpack.c.l.b16 %v374
        %v430 = vunpack.c.l.b16 %v375
        %v431 = vunpack.c.l.b16 %v376
        %v432 = vunpack.c.l.b16 %v377
        %v433 = vunpack.c.l.b16 %v378
        %v434 = vunpack.c.l.b16 %v379
        %v435 = vunpack.c.l.b16 %v380
        %v436 = vunpack.c.l.b16 %v381
        %v437 = vunpack.c.l.b16 %v382
        %v438 = vunpack.c.l.b16 %v383
        %v439 = vunpack.c.l.b16 %v384
        %v440 = vunpack.c.l.b16 %v385
        %v441 = vunpack.c.l.b16 %v386
        %v442 = vunpack.c.l.b16 %v387
        %v443 = vunpack.c.l.b16 %v388
        %v444 = vunpack.c.l.b16 %v389
        %v445 = vunpack.c.l.b16 %v390
        %v446 = vpack.c.b16 %v423, %v422
        %v447 = vpack.c.b16 %v425, %v424
        %v448 = vpack.c.b16 %v427, %v426
        %v449 = vpack.c.b16 %v429, %v428
        %v450 = vpack.c.b16 %v431, %v430
        %v451 = vpack.c.b16 %v433, %v432
        %v452 = vpack.c.b16 %v435, %v434
        %v453 = vpack.c.b16 %v437, %v436
        %v454 = vpack.c.b16 %v439, %v438
        %v455 = vpack.c.b16 %v441, %v440
        %v456 = vpack.c.b16 %v443, %v442
        %v457 = vpack.c.b16 %v445, %v444
        %v471 = vsel %vm358, %v364, 0
        %v474 = vsel %vm358, %v366, 0
        %476 = vmatprep.subr.bf16.mxu0 0
        %477 = vmatpush1.bf16.msra.mxu0 %v446
        %478 = vmatprep.subr.bf16.mxu0 0
        %479 = vmatpush1.bf16.msra.mxu0 %v447
        %480 = vmatprep.subr.bf16.mxu0 0
        %481 = vmatpush1.bf16.msra.mxu0 %v448
        %482 = vmatprep.subr.bf16.mxu0 0
        %483 = vmatpush1.bf16.msra.mxu0 %v449
        %484 = vmatprep.subr.bf16.mxu0 0
        %485 = vmatpush1.bf16.msra.mxu0 %v450
        %486 = vmatprep.subr.bf16.mxu0 0
        %487 = vmatpush1.bf16.msra.mxu0 %v451
        %488 = vmatprep.subr.bf16.mxu0 0
        %489 = vmatpush1.bf16.msra.mxu0 %v452
        %490 = vmatprep.subr.bf16.mxu0 0
        %491 = vmatpush1.bf16.msra.mxu0 %v453
        %492 = vmatprep.subr.bf16.mxu0 0
        %493 = vmatpush1.bf16.msra.mxu0 %v454
        %494 = vmatprep.subr.bf16.mxu0 0
        %495 = vmatpush1.bf16.msra.mxu0 %v455
        %496 = vmatprep.subr.bf16.mxu0 0
        %497 = vmatpush1.bf16.msra.mxu0 %v456
        %498 = vmatprep.subr.bf16.mxu0 0
        %499 = vmatpush1.bf16.msra.mxu0 %v457
        %500 = vmatprep.subr.bf16.mxu0 0
        %501 = vmatpush1.bf16.msra.mxu0 0
        %502 = vmatprep.subr.bf16.mxu0 0
        %503 = vmatpush1.bf16.msra.mxu0 0
        %504 = vmatprep.subr.bf16.mxu0 0
        %505 = vmatpush1.bf16.msra.mxu0 0
        %506 = vmatprep.subr.bf16.mxu0 0
        %507 = vmatpush1.bf16.msra.mxu0 0
        %508 = vmatprep.mubr.bf16.mxu0 %v471
        %509 = vmatmul.mubr.bf16.gmra.mrb[0].mxu0 %v363
        %v510 = vpop.f32.mrb[0].mxu0
        %v511 = vadd.f32 %v396, %v510
        %v512 = vpop.f32.mrb[0].mxu0
        %v513 = vpop.f32.mrb[0].mxu0
        %v514 = vadd.f32 %v396, %v513
        %v515 = vpop.f32.mrb[0].mxu0
        %516 = vmatprep.mubr.bf16.mxu0 %v474
        %517 = vmatmul.mubr.bf16.gmra.mrb[0].mxu0 %v365
        %v518 = vpop.f32.mrb[0].mxu0
        %v519 = vadd.f32 %v396, %v518
        %v520 = vpop.f32.mrb[0].mxu0
        %v521 = vpop.f32.mrb[0].mxu0
        %v522 = vadd.f32 %v396, %v521
        %v523 = vpop.f32.mrb[0].mxu0
        %524 = vdwg.mxu0
        %v525 = vmax.f32 %v511, 0.0
        %v526 = vmax.f32 %v514, 0.0
        %v527 = vmax.f32 %v519, 0.0
        %v528 = vmax.f32 %v522, 0.0
        %v529 = vrot.slane %v525, 7
        %v530 = vrot.slane %v526, 7
        %v531 = vrot.slane %v527, 7
        %v532 = vrot.slane %v528, 7
        %v533 = vsel %vm237, %v531, %v532
        %v534 = vsel %vm237, %v530, %v531
        %v535 = vsel %vm237, %v529, %v530
        %v536 = vsel %vm237, %v532, %v529
        %v537 = vsel %vm305, %v536, 0.0
        %v538 = vsel %vm306, %v535, 0.0
        %v539 = vsel %vm307, %v534, 0.0
        %v540 = vsel %vm308, %v533, 0.0
        %v541 = vrot.slane %v525, 1
        %v542 = vrot.slane %v526, 1
        %v543 = vrot.slane %v527, 1
        %v544 = vrot.slane %v528, 1
        %v545 = vsel %vm317, %v543, %v544
        %v546 = vsel %vm317, %v542, %v543
        %v547 = vsel %vm317, %v541, %v542
        %v548 = vsel %vm317, %v544, %v541
        %v549 = vsel %vm334, %v547, 0.0
        %v550 = vsel %vm335, %v546, 0.0
        %v551 = vsel %vm336, %v545, 0.0
        %v552 = vsel %vm337, %v548, 0.0
        %v553 = vpack.c.bf16 %v538, %v537
        %v554 = vpack.c.bf16 %v526, %v525
        %v555 = vpack.c.bf16 %v550, %v549
        %v556 = vpack.c.bf16 %v540, %v539
        %v557 = vpack.c.bf16 %v528, %v527
        %v558 = vpack.c.bf16 %v552, %v551
        %v559 = vld [vmem:[%s3] sm:$0xf]
        %v560 = vld [vmem:[%s3 + $0x4] sm:$0xf]
        %v561 = vld [vmem:[%s3 + $0x8] sm:$0xf]
        %v562 = vld [vmem:[%s3 + $0xc] sm:$0xf]
        %v563 = vld [vmem:[%s3 + $0x10] sm:$0xf]
        %v564 = vld [vmem:[%s3 + $0x14] sm:$0xf]
        %v565 = vld [vmem:[%s3 + $0x18] sm:$0xf]
        %v566 = vld [vmem:[%s3 + $0x1c] sm:$0xf]
        %v567 = vld [vmem:[%s3 + $0x20] sm:$0xf]
        %v568 = vld [vmem:[%s3 + $0x24] sm:$0xf]
        %v569 = vld [vmem:[%s3 + $0x28] sm:$0xf]
        %v570 = vld [vmem:[%s3 + $0x2c] sm:$0xf]
        %v571 = vld [vmem:[%s3 + $0x30] sm:$0xf]
        %v572 = vld [vmem:[%s3 + $0x34] sm:$0xf]
        %v573 = vld [vmem:[%s3 + $0x38] sm:$0xf]
        %v574 = vld [vmem:[%s3 + $0x3c] sm:$0xf]
        %v575 = vld [vmem:[%s3 + $0x40] sm:$0xf]
        %v576 = vld [vmem:[%s3 + $0x44] sm:$0xf]
        %v577 = vld [vmem:[%s3 + $0x48] sm:$0xf]
        %v578 = vld [vmem:[%s3 + $0x4c] sm:$0xf]
        %v579 = vld [vmem:[%s3 + $0x50] sm:$0xf]
        %v580 = vld [vmem:[%s3 + $0x54] sm:$0xf]
        %v581 = vld [vmem:[%s3 + $0x58] sm:$0xf]
        %v582 = vld [vmem:[%s3 + $0x5c] sm:$0xf]
        %v583 = vld [vmem:[%s3 + $0x60] sm:$0xf]
        %v584 = vld [vmem:[%s3 + $0x64] sm:$0xf]
        %v585 = vld [vmem:[%s3 + $0x68] sm:$0xf]
        %v586 = vld [vmem:[%s3 + $0x6c] sm:$0xf]
        %v587 = vld [vmem:[%s3 + $0x70] sm:$0xf]
        %v588 = vld [vmem:[%s3 + $0x74] sm:$0xf]
        %v589 = vld [vmem:[%s3 + $0x78] sm:$0xf]
        %v590 = vld [vmem:[%s3 + $0x7c] sm:$0xf]
        %v591 = vld [vmem:[%s3 + $0x80] sm:$0xf]
        %v592 = vld [vmem:[%s3 + $0x84] sm:$0xf]
        %v593 = vld [vmem:[%s3 + $0x88] sm:$0xf]
        %v594 = vld [vmem:[%s3 + $0x8c] sm:$0xf]
        %v595 = vld [vmem:[%s3 + $0x90] sm:$0xf]
        %v596 = vld [vmem:[%s3 + $0x94] sm:$0xf]
        %v597 = vld [vmem:[%s3 + $0x98] sm:$0xf]
        %v598 = vld [vmem:[%s3 + $0x9c] sm:$0xf]
        %v599 = vld [vmem:[%s3 + $0xa0] sm:$0xf]
        %v600 = vld [vmem:[%s3 + $0xa4] sm:$0xf]
        %v601 = vld [vmem:[%s3 + $0xa8] sm:$0xf]
        %v602 = vld [vmem:[%s3 + $0xac] sm:$0xf]
        %v603 = vld [vmem:[%s3 + $0xb0] sm:$0xf]
        %v604 = vld [vmem:[%s3 + $0xb4] sm:$0xf]
        %v605 = vld [vmem:[%s3 + $0xb8] sm:$0xf]
        %v606 = vld [vmem:[%s3 + $0xbc] sm:$0xf]
        %v607 = vld [vmem:[%s4] sm:$0x1]
        %v609 = vlaneseq
        %v610 = vshrl.u32 %v609, 7
        %v611 = vsub.s32 0, %v610
        %v612 = vrot.slane %v607, %v611
        %v662 = vunpack.c.l.b16 %v559
        %v663 = vunpack.c.l.b16 %v560
        %v664 = vunpack.c.l.b16 %v561
        %v665 = vunpack.c.l.b16 %v562
        %v666 = vunpack.c.l.b16 %v563
        %v667 = vunpack.c.l.b16 %v564
        %v668 = vunpack.c.l.b16 %v565
        %v669 = vunpack.c.l.b16 %v566
        %v670 = vunpack.c.l.b16 %v567
        %v671 = vunpack.c.l.b16 %v568
        %v672 = vunpack.c.l.b16 %v569
        %v673 = vunpack.c.l.b16 %v570
        %v674 = vunpack.c.l.b16 %v571
        %v675 = vunpack.c.l.b16 %v572
        %v676 = vunpack.c.l.b16 %v573
        %v677 = vunpack.c.l.b16 %v574
        %v678 = vunpack.c.l.b16 %v575
        %v679 = vunpack.c.l.b16 %v576
        %v680 = vunpack.c.l.b16 %v577
        %v681 = vunpack.c.l.b16 %v578
        %v682 = vunpack.c.l.b16 %v579
        %v683 = vunpack.c.l.b16 %v580
        %v684 = vunpack.c.l.b16 %v581
        %v685 = vunpack.c.l.b16 %v582
        %v686 = vunpack.c.l.b16 %v583
        %v687 = vunpack.c.l.b16 %v584
        %v688 = vunpack.c.l.b16 %v585
        %v689 = vunpack.c.l.b16 %v586
        %v690 = vunpack.c.l.b16 %v587
        %v691 = vunpack.c.l.b16 %v588
        %v692 = vunpack.c.l.b16 %v589
        %v693 = vunpack.c.l.b16 %v590
        %v694 = vunpack.c.l.b16 %v591
        %v695 = vunpack.c.l.b16 %v592
        %v696 = vunpack.c.l.b16 %v593
        %v697 = vunpack.c.l.b16 %v594
        %v698 = vunpack.c.l.b16 %v595
        %v699 = vunpack.c.l.b16 %v596
        %v700 = vunpack.c.l.b16 %v597
        %v701 = vunpack.c.l.b16 %v598
        %v702 = vunpack.c.l.b16 %v599
        %v703 = vunpack.c.l.b16 %v600
        %v704 = vunpack.c.l.b16 %v601
        %v705 = vunpack.c.l.b16 %v602
        %v706 = vunpack.c.l.b16 %v603
        %v707 = vunpack.c.l.b16 %v604
        %v708 = vunpack.c.l.b16 %v605
        %v709 = vunpack.c.l.b16 %v606
        %v710 = vpack.c.b16 %v663, %v662
        %v711 = vpack.c.b16 %v665, %v664
        %v712 = vpack.c.b16 %v667, %v666
        %v713 = vpack.c.b16 %v669, %v668
        %v714 = vpack.c.b16 %v671, %v670
        %v715 = vpack.c.b16 %v673, %v672
        %v716 = vpack.c.b16 %v675, %v674
        %v717 = vpack.c.b16 %v677, %v676
        %v718 = vpack.c.b16 %v679, %v678
        %v719 = vpack.c.b16 %v681, %v680
        %v720 = vpack.c.b16 %v683, %v682
        %v721 = vpack.c.b16 %v685, %v684
        %v722 = vpack.c.b16 %v687, %v686
        %v723 = vpack.c.b16 %v689, %v688
        %v724 = vpack.c.b16 %v691, %v690
        %v725 = vpack.c.b16 %v693, %v692
        %v726 = vpack.c.b16 %v695, %v694
        %v727 = vpack.c.b16 %v697, %v696
        %v728 = vpack.c.b16 %v699, %v698
        %v729 = vpack.c.b16 %v701, %v700
        %v730 = vpack.c.b16 %v703, %v702
        %v731 = vpack.c.b16 %v705, %v704
        %v732 = vpack.c.b16 %v707, %v706
        %v733 = vpack.c.b16 %v709, %v708
        %758 = vmatprep.subr.bf16.mxu0 0
        %759 = vmatpush1.bf16.msra.mxu0 %v710
        %760 = vmatprep.subr.bf16.mxu0 0
        %761 = vmatpush1.bf16.msra.mxu0 %v711
        %762 = vmatprep.subr.bf16.mxu0 0
        %763 = vmatpush1.bf16.msra.mxu0 %v712
        %764 = vmatprep.subr.bf16.mxu0 0
        %765 = vmatpush1.bf16.msra.mxu0 %v713
        %766 = vmatprep.subr.bf16.mxu0 0
        %767 = vmatpush1.bf16.msra.mxu0 %v714
        %768 = vmatprep.subr.bf16.mxu0 0
        %769 = vmatpush1.bf16.msra.mxu0 %v715
        %770 = vmatprep.subr.bf16.mxu0 0
        %771 = vmatpush1.bf16.msra.mxu0 %v716
        %772 = vmatprep.subr.bf16.mxu0 0
        %773 = vmatpush1.bf16.msra.mxu0 %v717
        %774 = vmatprep.subr.bf16.mxu0 0
        %775 = vmatpush1.bf16.msra.mxu0 %v718
        %776 = vmatprep.subr.bf16.mxu0 0
        %777 = vmatpush1.bf16.msra.mxu0 %v719
        %778 = vmatprep.subr.bf16.mxu0 0
        %779 = vmatpush1.bf16.msra.mxu0 %v720
        %780 = vmatprep.subr.bf16.mxu0 0
        %781 = vmatpush1.bf16.msra.mxu0 %v721
        %782 = vmatprep.subr.bf16.mxu0 0
        %783 = vmatpush1.bf16.msra.mxu0 %v722
        %784 = vmatprep.subr.bf16.mxu0 0
        %785 = vmatpush1.bf16.msra.mxu0 %v723
        %786 = vmatprep.subr.bf16.mxu0 0
        %787 = vmatpush1.bf16.msra.mxu0 %v724
        %788 = vmatprep.subr.bf16.mxu0 0
        %789 = vmatpush1.bf16.msra.mxu0 %v725
        %790 = vmatprep.mubr.bf16.mxu0 %v554
        %791 = vmatmul.mubr.bf16.gmra.mrb[0].mxu0 %v553
        %v792 = vpop.f32.mrb[0].mxu0
        %v793 = vadd.f32 %v612, %v792
        %v794 = vpop.f32.mrb[0].mxu0
        %v795 = vpop.f32.mrb[0].mxu0
        %v796 = vadd.f32 %v612, %v795
        %v797 = vpop.f32.mrb[0].mxu0
        %798 = vmatprep.mubr.bf16.mxu0 %v557
        %799 = vmatmul.mubr.bf16.gmra.mrb[0].mxu0 %v556
        %v800 = vpop.f32.mrb[0].mxu0
        %v801 = vadd.f32 %v612, %v800
        %v802 = vpop.f32.mrb[0].mxu0
        %v803 = vpop.f32.mrb[0].mxu0
        %v804 = vadd.f32 %v612, %v803
        %v805 = vpop.f32.mrb[0].mxu0
        %806 = vdwg.mxu0
        %807 = vmatprep.subr.bf16.mxu0 0
        %808 = vmatpush1.bf16.msra.mxu0 %v726
        %809 = vmatprep.subr.bf16.mxu0 0
        %810 = vmatpush1.bf16.msra.mxu0 %v727
        %811 = vmatprep.subr.bf16.mxu0 0
        %812 = vmatpush1.bf16.msra.mxu0 %v728
        %813 = vmatprep.subr.bf16.mxu0 0
        %814 = vmatpush1.bf16.msra.mxu0 %v729
        %815 = vmatprep.subr.bf16.mxu0 0
        %816 = vmatpush1.bf16.msra.mxu0 %v730
        %817 = vmatprep.subr.bf16.mxu0 0
        %818 = vmatpush1.bf16.msra.mxu0 %v731
        %819 = vmatprep.subr.bf16.mxu0 0
        %820 = vmatpush1.bf16.msra.mxu0 %v732
        %821 = vmatprep.subr.bf16.mxu0 0
        %822 = vmatpush1.bf16.msra.mxu0 %v733
        %823 = vmatprep.subr.bf16.mxu0 0
        %824 = vmatpush1.bf16.msra.mxu0 0
        %825 = vmatprep.subr.bf16.mxu0 0
        %826 = vmatpush1.bf16.msra.mxu0 0
        %827 = vmatprep.subr.bf16.mxu0 0
        %828 = vmatpush1.bf16.msra.mxu0 0
        %829 = vmatprep.subr.bf16.mxu0 0
        %830 = vmatpush1.bf16.msra.mxu0 0
        %831 = vmatprep.subr.bf16.mxu0 0
        %832 = vmatpush1.bf16.msra.mxu0 0
        %833 = vmatprep.subr.bf16.mxu0 0
        %834 = vmatpush1.bf16.msra.mxu0 0
        %835 = vmatprep.subr.bf16.mxu0 0
        %836 = vmatpush1.bf16.msra.mxu0 0
        %837 = vmatprep.subr.bf16.mxu0 0
        %838 = vmatpush1.bf16.msra.mxu0 0
        %839 = vmatprep.mubr.bf16.mxu0 0
        %840 = vmatmul.mubr.bf16.gmra.mrb[0].mxu0 %v555
        %v841 = vpop.f32.mrb[0].mxu0
        %v842 = vadd.f32 %v793, %v841
        %v843 = vpop.f32.mrb[0].mxu0
        %v844 = vpop.f32.mrb[0].mxu0
        %v845 = vadd.f32 %v796, %v844
        %v846 = vpop.f32.mrb[0].mxu0
        %847 = vmatprep.mubr.bf16.mxu0 0
        %848 = vmatmul.mubr.bf16.gmra.mrb[0].mxu0 %v558
        %v849 = vpop.f32.mrb[0].mxu0
        %v850 = vadd.f32 %v801, %v849
        %v851 = vpop.f32.mrb[0].mxu0
        %v852 = vpop.f32.mrb[0].mxu0
        %v853 = vadd.f32 %v804, %v852
        %v854 = vpop.f32.mrb[0].mxu0
        %855 = vdwg.mxu0
        %v856 = vadd.f32 %v842, %v227
        %v857 = vadd.f32 %v845, %v228
        %v858 = vadd.f32 %v850, %v229
        %v859 = vadd.f32 %v853, %v230
        %v860 = vmax.f32 %v856, 0.0
        %v861 = vmax.f32 %v857, 0.0
        %v862 = vmax.f32 %v858, 0.0
        %v863 = vmax.f32 %v859, 0.0
        %866 = vrot.lane.b32.xlu0 %v862, 64
        %v867 = vpop.permute.xlu0 %866
        %868 = vrot.lane.b32.xlu0 %v863, 64
        %v869 = vpop.permute.xlu0 %868
        %v872 = vsel %vm358, %v860, %v867
        %v873 = vsel %vm358, %v861, %v869
        %874 = vst [vmem:[%s218] sm:$0xff] %v872
        %875 = vst [vmem:[%s218 + $0x8] sm:$0xff] %v873
        %s876 = sand.u32 %s137, 1
        %s877 = scalar_lea.sflag [#allocation3], %s876
        %s878 = sand.u32 %s137, 1
        %s879 = smul.addr %s878, 16
        %s880 = scalar_lea.vmem [#allocation2], %s879
        // Predicated region
        $region41: #{tpu_custom_call.1} parent=39 // pred_check
          %p881 = pneg %p147
        $region42: #{tpu_custom_call.1} parent=39 // pred_check_branch
          %883 = sbr.rel (%p881) target = $region44
        $region43: #{tpu_custom_call.1} parent=39 // pred_region
          %s884 = smul.u32 2, %s19
          %s886 = ssub.s32 256, 256
          %887 = vsyncadd %s877, %s886
          %s888 = smul.addr %s884, 128
          %s889 = scalar_lea.hbm %s5, %s888
          %s890 = sshll.u32 %s880, 4
          %s891 = int_to_ptr.vmem [resolvable:$true] %s890
          %896 = dma.vmem_to_hbm [thread:$0]  %s891, 256, %s889, %s877, 128, 128, 8
        $region44: #{tpu_custom_call.1} parent=39 // pred_fallthru
          _
      $region40: #{tpu_custom_call.1} parent=5 // pred_fallthru
        _
      %p897 = scmp.le.s32.totalorder 2, %s14
      // Predicated region
      $region45: #{tpu_custom_call.1} parent=5 // pred_check
        %p898 = pneg %p897
      $region46: #{tpu_custom_call.1} parent=5 // pred_check_branch
        %900 = sbr.rel (%p898) target = $region48
      $region47: #{tpu_custom_call.1} parent=5 // pred_region
        %s901 = ssub.s32 %s14, 2
        // Predicated region
        $region49: #{tpu_custom_call.1} parent=47 // pred_check
          %p902 = pneg %p153
        $region50: #{tpu_custom_call.1} parent=47 // pred_check_branch
          %904 = sbr.rel (%p902) target = $region52
        $region51: #{tpu_custom_call.1} parent=47 // pred_region
          %s905 = sand.u32 %s138, 1
          %s906 = scalar_lea.sflag [#allocation3], %s905
          %s907 = sand.u32 %s138, 1
          %s908 = smul.addr %s907, 16
          %s909 = scalar_lea.vmem [#allocation2], %s908
          %910 = dma.done %s906, 256
        $region52: #{tpu_custom_call.1} parent=47 // pred_fallthru
          _
      $region48: #{tpu_custom_call.1} parent=5 // pred_fallthru
        _
    $region6: #{tpu_custom_call.1} parent=1 // loop_footer
      %s18 = sadd.s32 1, %s14
    $region7: #{tpu_custom_call.1} parent=1 // loop_footer_branch
      %13 = sbr.rel target = $region3
    $region8: #{tpu_custom_call.1} parent=1 // loop_exit
      _
    %911 = vsyncpa [#allocation3], 1
    %s912 = scalar_lea.sflag [#allocation3], 1
    %913 = vsyncpa %s912, 1

</llo_original>
